<compile_context>
chip_gen: v7x
topology: tpu7x:2x2x1
jax: 0.10.0
libtpu: 0.0.40
codegen_flags: <defaults>
</compile_context>

<pallas_src>
import functools
import math

import jax
import jax.numpy as jnp
from jax.experimental import pallas as pl
from jax.experimental.pallas import tpu as pltpu


def _token_embedding_kernel(tok_ref, table_hbm, out_ref, sem, *,
                            block_t, unroll, scale):
    """Gather `block_t` embedding rows straight into the output block.

    tok_ref   : (n_pad,) int32 in SMEM (scalar prefetch)
    table_hbm : (vocab, emb) in HBM (pl.ANY) -- accessed only via manual DMA
    out_ref   : (block_t, emb) VMEM output block (doubles as the DMA landing
                buffer)
    sem       : single DMA semaphore shared by all row copies of this step
    """
    base = pl.multiple_of(pl.program_id(0) * block_t, block_t)

    # Issue all row-gather DMAs for this block.  The loop is partially
    # unrolled so the scheduler can pack descriptor issues back-to-back
    # (descriptor issue is the binding resource for small rows).
    @pl.loop(0, block_t // unroll)
    def _issue(g):
        t0 = pl.multiple_of(g * unroll, unroll)
        for u in range(unroll):
            t = t0 + u
            row = tok_ref[base + t]
            pltpu.make_async_copy(table_hbm.at[row], out_ref.at[t], sem).start()

    # One wait covering every row copy of this block.  The descriptor is only
    # used for its byte count (block_t * emb * itemsize == the sum of the
    # block_t row-copy signals); no copy is started here.
    pltpu.make_async_copy(out_ref, out_ref, sem).wait()

    # Scale in place in the table's native dtype (no f32 round trip).
    out_ref[...] = out_ref[...] * jnp.asarray(scale, dtype=out_ref.dtype)


def token_embedding(tokens, emb_table, *, block_t=None, unroll=8):
    """tokens: int array (seq, batch); emb_table: (vocab, emb).

    Returns emb_table[tokens] * sqrt(emb_size), shape (seq, batch, emb),
    in the table's dtype.

    Notes:
      * out-of-range token ids are clamped (PyTorch nn.Embedding would raise).
      * the flattened token array is scalar-prefetched into SMEM.
        # TODO(synk): chunk tok_flat (outer grid axis) for huge seq*batch
        # (>~100K tokens) to stay within SMEM.
        # TODO(synk): add a resident-table in-VMEM gather fast path for tiny
        # vocabularies to skip per-row DMA descriptor issue entirely.
    """
    seq, batch = tokens.shape
    vocab_size, emb_size = emb_table.shape
    n = seq * batch
    scale = math.sqrt(emb_size)
    itemsize = jnp.dtype(emb_table.dtype).itemsize

    sub = max(8, 32 // itemsize)          # sublane multiple for this dtype
    row_bytes = emb_size * itemsize

    if block_t is None:
        # ~4 MiB gather window per buffer; the output block is double-buffered
        # by the pipeline, so total VMEM stays well under the 32 MiB scoped
        # default on v5e/v6e/v7x while amortizing per-step overhead and
        # keeping many row DMAs in flight.
        block_t = min(512, max(sub, (4 * 1024 * 1024) // max(row_bytes, 1)))
    block_t = max(sub, (int(block_t) // sub) * sub)
    n_sub = ((n + sub - 1) // sub) * sub
    block_t = int(min(block_t, n_sub))    # don't pad far beyond n
    unroll = math.gcd(max(1, int(unroll)), block_t)

    n_blocks = (n + block_t - 1) // block_t
    n_pad = n_blocks * block_t

    # Flatten, clamp out-of-range ids so the DMA gather never reads OOB, and
    # pad the token count to a multiple of block_t (output is sliced back).
    tok_flat = jnp.clip(tokens.reshape(n).astype(jnp.int32), 0, vocab_size - 1)
    if n_pad != n:
        tok_flat = jnp.pad(tok_flat, (0, n_pad - n))

    kernel = functools.partial(_token_embedding_kernel,
                               block_t=block_t, unroll=unroll, scale=scale)

    cost = pl.CostEstimate(
        flops=n_pad * emb_size,                           # the scale multiply
        transcendentals=0,
        bytes_accessed=2 * n_pad * emb_size * itemsize,   # row gather + writeback
    )

    block_bytes = block_t * emb_size * itemsize
    vmem_limit = int(min(32 * 1024 * 1024, max(4 * 1024 * 1024, 4 * block_bytes)))

    out_flat = pl.pallas_call(
        kernel,
        out_shape=jax.ShapeDtypeStruct((n_pad, emb_size), emb_table.dtype),
        grid_spec=pltpu.PrefetchScalarGridSpec(
            num_scalar_prefetch=1,                        # tok_flat -> SMEM
            grid=(n_blocks,),
            in_specs=[
                pl.BlockSpec(memory_space=pl.ANY),        # table stays in HBM
            ],
            out_specs=pl.BlockSpec((block_t, emb_size), lambda i, tok: (i, 0)),
            scratch_shapes=[
                pltpu.SemaphoreType.DMA(()),
            ],
        ),
        compiler_params=pltpu.CompilerParams(
            dimension_semantics=("parallel",),
            vmem_limit_bytes=vmem_limit),
        cost_estimate=cost,
    )(tok_flat, emb_table)

    return out_flat[:n].reshape(seq, batch, emb_size)


def _run_case(case_id, vocab_size, emb_size, seq_len, batch, dtype, **kw):
    key = jax.random.fold_in(jax.random.PRNGKey(0), case_id)
    k_emb, k_tok = jax.random.split(key)
    emb_table = jax.random.normal(k_emb, (vocab_size, emb_size),
                                  dtype=jnp.float32).astype(dtype)
    tokens = jax.random.randint(k_tok, (seq_len, batch), 0, vocab_size,
                                dtype=jnp.int32)

    out = jax.block_until_ready(token_embedding(tokens, emb_table, **kw))

    # Reference (plain JAX) — same semantics as nn.Embedding(tokens.long())
    # * sqrt(emb_size), with the scale applied in the table's dtype.
    ref = emb_table[tokens] * jnp.asarray(math.sqrt(emb_size), dtype=dtype)
    assert out.shape == (seq_len, batch, emb_size)
    assert out.dtype == emb_table.dtype
    tol = 1e-5 if dtype == jnp.float32 else 2e-2
    assert jnp.allclose(out.astype(jnp.float32), ref.astype(jnp.float32),
                        atol=tol, rtol=tol)


if __name__ == "__main__":
    # 1) Original small demo (f32, single block, default block_t).
    _run_case(1, vocab_size=64, emb_size=128, seq_len=8, batch=2,
              dtype=jnp.float32)
    # 2) Multi-block grid with a padded tail (39 tokens, 3 blocks of 16).
    _run_case(2, vocab_size=96, emb_size=256, seq_len=13, batch=3,
              dtype=jnp.float32, block_t=16)
    # 3) bf16 table: native-dtype scaling path (no f32 round trip).
    _run_case(3, vocab_size=64, emb_size=256, seq_len=5, batch=3,
              dtype=jnp.bfloat16)

    print("KERNEL_OK")
</pallas_src>

<mosaic_0001>
module attributes {stable_mosaic.version = 11 : i64} {
  func.func @_token_embedding_kernel(%arg0: i32, %arg1: memref<16xi32, #tpu.memory_space<smem>>, %arg2: memref<64x128xf32, #tpu.memory_space<any>>, %arg3: memref<16x128xf32, #tpu.memory_space<vmem>>, %arg4: memref<!tpu.dma_semaphore, #tpu.memory_space<semaphore_mem>>) attributes {dimension_semantics = [#tpu.dimension_semantics<parallel>], iteration_bounds = array<i64: 1>, scalar_prefetch = 1 : i64, scratch_operands = 1 : i64, tpu.core_type = #tpu.core_type<tc>, window_params = [{}, {transform_indices = @transform_1, window_bounds = array<i64: 16, 128>}]} {
    %c16_i32 = arith.constant 16 : i32
    %0 = arith.muli %arg0, %c16_i32 : i32
    %1 = tpu.assume_multiple %0, 16 : i32
    %c0_i32 = arith.constant 0 : i32
    %c2_i32 = arith.constant 2 : i32
    %2 = arith.addi %c0_i32, %c2_i32 : i32
    %c1_i32 = arith.constant 1 : i32
    scf.for %arg5 = %c0_i32 to %2 step %c1_i32  : i32 {
      %c1_i32_4 = arith.constant 1 : i32
      %7 = arith.muli %arg5, %c1_i32_4 : i32
      %c0_i32_5 = arith.constant 0 : i32
      %8 = arith.addi %c0_i32_5, %7 : i32
      %c8_i32 = arith.constant 8 : i32
      %9 = arith.muli %8, %c8_i32 : i32
      %10 = tpu.assume_multiple %9, 8 : i32
      %c0_i32_6 = arith.constant 0 : i32
      %11 = arith.addi %10, %c0_i32_6 : i32
      %12 = arith.addi %1, %11 : i32
      %13 = arith.index_cast %12 : i32 to index
      %14 = memref.load %arg1[%13] : memref<16xi32, #tpu.memory_space<smem>>
      %c0_i32_7 = arith.constant 0 : i32
      %15 = tpu.memref_slice %arg2[%14, %c0_i32_7] : memref<64x128xf32, #tpu.memory_space<any>> -> memref<1x128xf32, #tpu.memory_space<any>>
      %16 = tpu.memref_squeeze %15 : memref<1x128xf32, #tpu.memory_space<any>> -> memref<128xf32, #tpu.memory_space<any>>
      %c0_i32_8 = arith.constant 0 : i32
      %17 = tpu.memref_slice %arg3[%11, %c0_i32_8] : memref<16x128xf32, #tpu.memory_space<vmem>> -> memref<1x128xf32, #tpu.memory_space<vmem>>
      %18 = tpu.memref_squeeze %17 : memref<1x128xf32, #tpu.memory_space<vmem>> -> memref<128xf32, #tpu.memory_space<vmem>>
      tpu.enqueue_dma source(%16 : memref<128xf32, #tpu.memory_space<any>>) target(%18 : memref<128xf32, #tpu.memory_space<vmem>>) target_semaphore(%arg4 : memref<!tpu.dma_semaphore, #tpu.memory_space<semaphore_mem>>)
      %c1_i32_9 = arith.constant 1 : i32
      %19 = arith.addi %10, %c1_i32_9 : i32
      %20 = arith.addi %1, %19 : i32
      %21 = arith.index_cast %20 : i32 to index
      %22 = memref.load %arg1[%21] : memref<16xi32, #tpu.memory_space<smem>>
      %c0_i32_10 = arith.constant 0 : i32
      %23 = tpu.memref_slice %arg2[%22, %c0_i32_10] : memref<64x128xf32, #tpu.memory_space<any>> -> memref<1x128xf32, #tpu.memory_space<any>>
      %24 = tpu.memref_squeeze %23 : memref<1x128xf32, #tpu.memory_space<any>> -> memref<128xf32, #tpu.memory_space<any>>
      %c0_i32_11 = arith.constant 0 : i32
      %25 = tpu.memref_slice %arg3[%19, %c0_i32_11] : memref<16x128xf32, #tpu.memory_space<vmem>> -> memref<1x128xf32, #tpu.memory_space<vmem>>
      %26 = tpu.memref_squeeze %25 : memref<1x128xf32, #tpu.memory_space<vmem>> -> memref<128xf32, #tpu.memory_space<vmem>>
      tpu.enqueue_dma source(%24 : memref<128xf32, #tpu.memory_space<any>>) target(%26 : memref<128xf32, #tpu.memory_space<vmem>>) target_semaphore(%arg4 : memref<!tpu.dma_semaphore, #tpu.memory_space<semaphore_mem>>)
      %c2_i32_12 = arith.constant 2 : i32
      %27 = arith.addi %10, %c2_i32_12 : i32
      %28 = arith.addi %1, %27 : i32
      %29 = arith.index_cast %28 : i32 to index
      %30 = memref.load %arg1[%29] : memref<16xi32, #tpu.memory_space<smem>>
      %c0_i32_13 = arith.constant 0 : i32
      %31 = tpu.memref_slice %arg2[%30, %c0_i32_13] : memref<64x128xf32, #tpu.memory_space<any>> -> memref<1x128xf32, #tpu.memory_space<any>>
      %32 = tpu.memref_squeeze %31 : memref<1x128xf32, #tpu.memory_space<any>> -> memref<128xf32, #tpu.memory_space<any>>
      %c0_i32_14 = arith.constant 0 : i32
      %33 = tpu.memref_slice %arg3[%27, %c0_i32_14] : memref<16x128xf32, #tpu.memory_space<vmem>> -> memref<1x128xf32, #tpu.memory_space<vmem>>
      %34 = tpu.memref_squeeze %33 : memref<1x128xf32, #tpu.memory_space<vmem>> -> memref<128xf32, #tpu.memory_space<vmem>>
      tpu.enqueue_dma source(%32 : memref<128xf32, #tpu.memory_space<any>>) target(%34 : memref<128xf32, #tpu.memory_space<vmem>>) target_semaphore(%arg4 : memref<!tpu.dma_semaphore, #tpu.memory_space<semaphore_mem>>)
      %c3_i32 = arith.constant 3 : i32
      %35 = arith.addi %10, %c3_i32 : i32
      %36 = arith.addi %1, %35 : i32
      %37 = arith.index_cast %36 : i32 to index
      %38 = memref.load %arg1[%37] : memref<16xi32, #tpu.memory_space<smem>>
      %c0_i32_15 = arith.constant 0 : i32
      %39 = tpu.memref_slice %arg2[%38, %c0_i32_15] : memref<64x128xf32, #tpu.memory_space<any>> -> memref<1x128xf32, #tpu.memory_space<any>>
      %40 = tpu.memref_squeeze %39 : memref<1x128xf32, #tpu.memory_space<any>> -> memref<128xf32, #tpu.memory_space<any>>
      %c0_i32_16 = arith.constant 0 : i32
      %41 = tpu.memref_slice %arg3[%35, %c0_i32_16] : memref<16x128xf32, #tpu.memory_space<vmem>> -> memref<1x128xf32, #tpu.memory_space<vmem>>
      %42 = tpu.memref_squeeze %41 : memref<1x128xf32, #tpu.memory_space<vmem>> -> memref<128xf32, #tpu.memory_space<vmem>>
      tpu.enqueue_dma source(%40 : memref<128xf32, #tpu.memory_space<any>>) target(%42 : memref<128xf32, #tpu.memory_space<vmem>>) target_semaphore(%arg4 : memref<!tpu.dma_semaphore, #tpu.memory_space<semaphore_mem>>)
      %c4_i32 = arith.constant 4 : i32
      %43 = arith.addi %10, %c4_i32 : i32
      %44 = arith.addi %1, %43 : i32
      %45 = arith.index_cast %44 : i32 to index
      %46 = memref.load %arg1[%45] : memref<16xi32, #tpu.memory_space<smem>>
      %c0_i32_17 = arith.constant 0 : i32
      %47 = tpu.memref_slice %arg2[%46, %c0_i32_17] : memref<64x128xf32, #tpu.memory_space<any>> -> memref<1x128xf32, #tpu.memory_space<any>>
      %48 = tpu.memref_squeeze %47 : memref<1x128xf32, #tpu.memory_space<any>> -> memref<128xf32, #tpu.memory_space<any>>
      %c0_i32_18 = arith.constant 0 : i32
      %49 = tpu.memref_slice %arg3[%43, %c0_i32_18] : memref<16x128xf32, #tpu.memory_space<vmem>> -> memref<1x128xf32, #tpu.memory_space<vmem>>
      %50 = tpu.memref_squeeze %49 : memref<1x128xf32, #tpu.memory_space<vmem>> -> memref<128xf32, #tpu.memory_space<vmem>>
      tpu.enqueue_dma source(%48 : memref<128xf32, #tpu.memory_space<any>>) target(%50 : memref<128xf32, #tpu.memory_space<vmem>>) target_semaphore(%arg4 : memref<!tpu.dma_semaphore, #tpu.memory_space<semaphore_mem>>)
      %c5_i32 = arith.constant 5 : i32
      %51 = arith.addi %10, %c5_i32 : i32
      %52 = arith.addi %1, %51 : i32
      %53 = arith.index_cast %52 : i32 to index
      %54 = memref.load %arg1[%53] : memref<16xi32, #tpu.memory_space<smem>>
      %c0_i32_19 = arith.constant 0 : i32
      %55 = tpu.memref_slice %arg2[%54, %c0_i32_19] : memref<64x128xf32, #tpu.memory_space<any>> -> memref<1x128xf32, #tpu.memory_space<any>>
      %56 = tpu.memref_squeeze %55 : memref<1x128xf32, #tpu.memory_space<any>> -> memref<128xf32, #tpu.memory_space<any>>
      %c0_i32_20 = arith.constant 0 : i32
      %57 = tpu.memref_slice %arg3[%51, %c0_i32_20] : memref<16x128xf32, #tpu.memory_space<vmem>> -> memref<1x128xf32, #tpu.memory_space<vmem>>
      %58 = tpu.memref_squeeze %57 : memref<1x128xf32, #tpu.memory_space<vmem>> -> memref<128xf32, #tpu.memory_space<vmem>>
      tpu.enqueue_dma source(%56 : memref<128xf32, #tpu.memory_space<any>>) target(%58 : memref<128xf32, #tpu.memory_space<vmem>>) target_semaphore(%arg4 : memref<!tpu.dma_semaphore, #tpu.memory_space<semaphore_mem>>)
      %c6_i32 = arith.constant 6 : i32
      %59 = arith.addi %10, %c6_i32 : i32
      %60 = arith.addi %1, %59 : i32
      %61 = arith.index_cast %60 : i32 to index
      %62 = memref.load %arg1[%61] : memref<16xi32, #tpu.memory_space<smem>>
      %c0_i32_21 = arith.constant 0 : i32
      %63 = tpu.memref_slice %arg2[%62, %c0_i32_21] : memref<64x128xf32, #tpu.memory_space<any>> -> memref<1x128xf32, #tpu.memory_space<any>>
      %64 = tpu.memref_squeeze %63 : memref<1x128xf32, #tpu.memory_space<any>> -> memref<128xf32, #tpu.memory_space<any>>
      %c0_i32_22 = arith.constant 0 : i32
      %65 = tpu.memref_slice %arg3[%59, %c0_i32_22] : memref<16x128xf32, #tpu.memory_space<vmem>> -> memref<1x128xf32, #tpu.memory_space<vmem>>
      %66 = tpu.memref_squeeze %65 : memref<1x128xf32, #tpu.memory_space<vmem>> -> memref<128xf32, #tpu.memory_space<vmem>>
      tpu.enqueue_dma source(%64 : memref<128xf32, #tpu.memory_space<any>>) target(%66 : memref<128xf32, #tpu.memory_space<vmem>>) target_semaphore(%arg4 : memref<!tpu.dma_semaphore, #tpu.memory_space<semaphore_mem>>)
      %c7_i32 = arith.constant 7 : i32
      %67 = arith.addi %10, %c7_i32 : i32
      %68 = arith.addi %1, %67 : i32
      %69 = arith.index_cast %68 : i32 to index
      %70 = memref.load %arg1[%69] : memref<16xi32, #tpu.memory_space<smem>>
      %c0_i32_23 = arith.constant 0 : i32
      %71 = tpu.memref_slice %arg2[%70, %c0_i32_23] : memref<64x128xf32, #tpu.memory_space<any>> -> memref<1x128xf32, #tpu.memory_space<any>>
      %72 = tpu.memref_squeeze %71 : memref<1x128xf32, #tpu.memory_space<any>> -> memref<128xf32, #tpu.memory_space<any>>
      %c0_i32_24 = arith.constant 0 : i32
      %73 = tpu.memref_slice %arg3[%67, %c0_i32_24] : memref<16x128xf32, #tpu.memory_space<vmem>> -> memref<1x128xf32, #tpu.memory_space<vmem>>
      %74 = tpu.memref_squeeze %73 : memref<1x128xf32, #tpu.memory_space<vmem>> -> memref<128xf32, #tpu.memory_space<vmem>>
      tpu.enqueue_dma source(%72 : memref<128xf32, #tpu.memory_space<any>>) target(%74 : memref<128xf32, #tpu.memory_space<vmem>>) target_semaphore(%arg4 : memref<!tpu.dma_semaphore, #tpu.memory_space<semaphore_mem>>)
    }
    %c2_i32_0 = arith.constant 2 : i32
    tpu.wait_dma2 semaphore(%arg4 : memref<!tpu.dma_semaphore, #tpu.memory_space<semaphore_mem>>) src(%arg3 : memref<16x128xf32, #tpu.memory_space<vmem>>) dst(%arg3 : memref<16x128xf32, #tpu.memory_space<vmem>>)
    %c0 = arith.constant 0 : index
    %c0_1 = arith.constant 0 : index
    %3 = vector.load %arg3[%c0, %c0_1] : memref<16x128xf32, #tpu.memory_space<vmem>>, vector<16x128xf32>
    %cst = arith.constant 11.3137083 : f32
    %4 = vector.broadcast %cst : f32 to vector<16x128xf32>
    %5 = arith.mulf %3, %4 : vector<16x128xf32>
    %c0_2 = arith.constant 0 : index
    %c0_3 = arith.constant 0 : index
    %6 = vector.load %arg3[%c0_2, %c0_3] : memref<16x128xf32, #tpu.memory_space<vmem>>, vector<16x128xf32>
    tpu.vector_store %arg3[%c0_2, %c0_3], %5 {strides = array<i32>} : memref<16x128xf32, #tpu.memory_space<vmem>>, vector<16x128xf32>,
    return
  }
  func.func @transform_1(%arg0: i32, %arg1: memref<16xi32, #tpu.memory_space<smem>>) -> (i32, i32) {
    %c0_i32 = arith.constant 0 : i32
    %c0_i32_0 = arith.constant 0 : i32
    return %arg0, %c0_i32 : i32, i32
  }
}

</mosaic_0001>

<llo_original>
// kernel: tpu_custom_call.1
$region0: #{tpu_custom_call.1}
  #allocation0 [shape = 'u32[]', space=smem, size = 0x4, offset = 0x4, fixed_abs, tag = 'smem constant byte address 0x4 - core index']
  #allocation1 [shape = 'u32[144,128]{1,0:T(1,128)}', space=vmem, size = 0x12000, scoped, tag = 'internal scratch']
  #allocation2 [shape = 's32[1]{0}', space=sflag, size = 0x4, scoped, tag = 'scratch operand']
  #allocation3 [shape = 's32[1]{0}', space=sflag, size = 0x4, scoped, tag = 'scoped memory for tpu_custom_call.1']
  #allocation4 [shape = 'u8[512]{0}', space=smem, size = 0x200, scoped, tag = 'prefetched SMEM operand 0']
  #allocation7 [shape = 's32[]', space=sflag, size = 0x4, offset = 0, fixed_abs, tag = 'sflag constant byte address 0x0 - dummy sync flag']
  #allocation8 [shape = 's32[]', space=sflag, size = 0x4, offset = 0, fixed_abs, tag = 'sflag constant byte address 0x0 - dummy sync flag']
  #allocation9 [shape = 'u32[]', space=smem, size = 0x4, offset = 0x44, fixed_abs, tag = 'smem constant byte address 0x44 - assertion arg 0']
  #allocation10 [shape = 'u32[]', space=smem, size = 0x4, offset = 0x48, fixed_abs, tag = 'smem constant byte address 0x48 - assertion arg 1']
  #allocation11 [shape = 's32[]', space=sflag, size = 0x4, offset = 0, fixed_abs, tag = 'sflag constant byte address 0x0 - dummy sync flag']
  #allocation12 [shape = 's32[]', space=sflag, size = 0x4, offset = 0, fixed_abs, tag = 'sflag constant byte address 0x0 - dummy sync flag']
  #allocation13 [shape = 's32[]', space=sflag, size = 0x4, offset = 0, fixed_abs, tag = 'sflag constant byte address 0x0 - dummy sync flag']
  #allocation14 [shape = 's32[]', space=sflag, size = 0x4, offset = 0, fixed_abs, tag = 'sflag constant byte address 0x0 - dummy sync flag']
  #allocation15 [shape = 's32[]', space=sflag, size = 0x4, offset = 0, fixed_abs, tag = 'sflag constant byte address 0x0 - dummy sync flag']
  #allocation16 [shape = 's32[]', space=sflag, size = 0x4, offset = 0, fixed_abs, tag = 'sflag constant byte address 0x0 - dummy sync flag']
  #allocation17 [shape = 's32[]', space=sflag, size = 0x4, offset = 0, fixed_abs, tag = 'sflag constant byte address 0x0 - dummy sync flag']
  #allocation18 [shape = 's32[]', space=sflag, size = 0x4, offset = 0, fixed_abs, tag = 'sflag constant byte address 0x0 - dummy sync flag']
  #allocation19 [shape = 's32[]', space=sflag, size = 0x4, offset = 0, fixed_abs, tag = 'sflag constant byte address 0x0 - dummy sync flag']
  #allocation20 [shape = 's32[]', space=sflag, size = 0x4, offset = 0, fixed_abs, tag = 'sflag constant byte address 0x0 - dummy sync flag']
  #allocation21 [shape = 's32[]', space=sflag, size = 0x4, offset = 0, fixed_abs, tag = 'sflag constant byte address 0x0 - dummy sync flag']
  #allocation22 [shape = 's32[]', space=sflag, size = 0x4, offset = 0, fixed_abs, tag = 'sflag constant byte address 0x0 - dummy sync flag']
  #allocation23 [shape = 's32[]', space=sflag, size = 0x4, offset = 0, fixed_abs, tag = 'sflag constant byte address 0x0 - dummy sync flag']
  #allocation24 [shape = 's32[]', space=sflag, size = 0x4, offset = 0, fixed_abs, tag = 'sflag constant byte address 0x0 - dummy sync flag']
  %s0 = inlined_call_operand.hbm [shape: s32[16], index: 0, kind: input, shape index: {}]
  %s1 = inlined_call_operand.hbm [shape: f32[64,128], index: 1, kind: input, shape index: {}]
  %s2 = inlined_call_operand.hbm [shape: f32[16,128], index: 2, kind: output, shape index: {}]
  %s3 = sld [smem:[#allocation0]]
  $region49: #{tpu_custom_call.1} parent=0
    _
  %s5 = ssub.s32 1, %s3
  %s6 = scalar_select 0, %s5, %s3
  %8 = dma.hbm_to_smem %s0, 16, [#allocation4], [#allocation3]
  %9 = dma.done [#allocation3], 16
  %10 = sfence
  $region1: #{tpu_custom_call.1} parent=0
    #allocation5 [shape = 'u8[8192]{0}', space=vmem, size = 0x2000, scoped, tag = 'output window, operand 0, single buffered']
    #allocation6 [shape = 's32[1]{0}', space=sflag, size = 0x4, scoped, tag = 'scoped memory for tpu_custom_call.1']
    %11 = vsyncpa [#allocation6], 0
    %s12 = smul.u32 0, 16
    loop: start=0, step=1, limit=2
    $region2: #{tpu_custom_call.1} parent=1 // loop_pre_header
      _
    $region3: #{tpu_custom_call.1} parent=1 // loop_header
      %s14 = sphi 0, %s18
      %p15 = scmp.ge.s32.totalorder %s14, 2
    $region4: #{tpu_custom_call.1} parent=1 // loop_header_branch
      %17 = sbr.rel (%p15) target = $region8
    $region5: #{tpu_custom_call.1} parent=1 // loop_body
      %s19 = smul.u32 %s14, 8
      %s20 = sadd.s32 %s12, %s19
      %s21 = sld [smem:[#allocation4 + %s20]]
      %s22 = smul.addr %s21, 16
      %s23 = scalar_lea.hbm %s1, %s22
      %s24 = scalar_lea.vmem [#allocation5], %s19
      // Predicated region
      $region9: #{tpu_custom_call.1} parent=5 // pred_check
        _
      $region10: #{tpu_custom_call.1} parent=5 // pred_check_branch
        %26 = sbr.rel target = $region12
      $region11: #{tpu_custom_call.1} parent=5 // pred_region
        %27 = sst [smem:[#allocation9]] [#allocation8]
        %28 = sst [smem:[#allocation10]] [#allocation7]
      $region12: #{tpu_custom_call.1} parent=5 // pred_fallthru
        _
      %30 = shalt.err (0)
      %s32 = sshll.u32 %s24, 4
      %s33 = int_to_ptr.vmem [resolvable:$true] %s32
      %35 = dma.hbm_to_vmem [thread:$0]  %s23, 16, %s33, [#allocation2]
      %s36 = sadd.s32 %s19, 1
      %s37 = sadd.s32 %s12, %s36
      %s38 = sld [smem:[#allocation4 + %s37]]
      %s39 = smul.addr %s38, 16
      %s40 = scalar_lea.hbm %s1, %s39
      %s41 = scalar_lea.vmem [#allocation5], %s36
      // Predicated region
      $region13: #{tpu_custom_call.1} parent=5 // pred_check
        _
      $region14: #{tpu_custom_call.1} parent=5 // pred_check_branch
        %43 = sbr.rel target = $region16
      $region15: #{tpu_custom_call.1} parent=5 // pred_region
        %44 = sst [smem:[#allocation9]] [#allocation12]
        %45 = sst [smem:[#allocation10]] [#allocation11]
      $region16: #{tpu_custom_call.1} parent=5 // pred_fallthru
        _
      %47 = shalt.err (0)
      %s49 = sshll.u32 %s41, 4
      %s50 = int_to_ptr.vmem [resolvable:$true] %s49
      %52 = dma.hbm_to_vmem [thread:$0]  %s40, 16, %s50, [#allocation2]
      %s53 = sadd.s32 %s19, 2
      %s54 = sadd.s32 %s12, %s53
      %s55 = sld [smem:[#allocation4 + %s54]]
      %s56 = smul.addr %s55, 16
      %s57 = scalar_lea.hbm %s1, %s56
      %s58 = scalar_lea.vmem [#allocation5], %s53
      // Predicated region
      $region17: #{tpu_custom_call.1} parent=5 // pred_check
        _
      $region18: #{tpu_custom_call.1} parent=5 // pred_check_branch
        %60 = sbr.rel target = $region20
      $region19: #{tpu_custom_call.1} parent=5 // pred_region
        %61 = sst [smem:[#allocation9]] [#allocation14]
        %62 = sst [smem:[#allocation10]] [#allocation13]
      $region20: #{tpu_custom_call.1} parent=5 // pred_fallthru
        _
      %64 = shalt.err (0)
      %s66 = sshll.u32 %s58, 4
      %s67 = int_to_ptr.vmem [resolvable:$true] %s66
      %69 = dma.hbm_to_vmem [thread:$0]  %s57, 16, %s67, [#allocation2]
      %s70 = sadd.s32 %s19, 3
      %s71 = sadd.s32 %s12, %s70
      %s72 = sld [smem:[#allocation4 + %s71]]
      %s73 = smul.addr %s72, 16
      %s74 = scalar_lea.hbm %s1, %s73
      %s75 = scalar_lea.vmem [#allocation5], %s70
      // Predicated region
      $region21: #{tpu_custom_call.1} parent=5 // pred_check
        _
      $region22: #{tpu_custom_call.1} parent=5 // pred_check_branch
        %77 = sbr.rel target = $region24
      $region23: #{tpu_custom_call.1} parent=5 // pred_region
        %78 = sst [smem:[#allocation9]] [#allocation16]
        %79 = sst [smem:[#allocation10]] [#allocation15]
      $region24: #{tpu_custom_call.1} parent=5 // pred_fallthru
        _
      %81 = shalt.err (0)
      %s83 = sshll.u32 %s75, 4
      %s84 = int_to_ptr.vmem [resolvable:$true] %s83
      %86 = dma.hbm_to_vmem [thread:$0]  %s74, 16, %s84, [#allocation2]
      %s87 = sadd.s32 %s19, 4
      %s88 = sadd.s32 %s12, %s87
      %s89 = sld [smem:[#allocation4 + %s88]]
      %s90 = smul.addr %s89, 16
      %s91 = scalar_lea.hbm %s1, %s90
      %s92 = scalar_lea.vmem [#allocation5], %s87
      // Predicated region
      $region25: #{tpu_custom_call.1} parent=5 // pred_check
        _
      $region26: #{tpu_custom_call.1} parent=5 // pred_check_branch
        %94 = sbr.rel target = $region28
      $region27: #{tpu_custom_call.1} parent=5 // pred_region
        %95 = sst [smem:[#allocation9]] [#allocation18]
        %96 = sst [smem:[#allocation10]] [#allocation17]
      $region28: #{tpu_custom_call.1} parent=5 // pred_fallthru
        _
      %98 = shalt.err (0)
      %s100 = sshll.u32 %s92, 4
      %s101 = int_to_ptr.vmem [resolvable:$true] %s100
      %103 = dma.hbm_to_vmem [thread:$0]  %s91, 16, %s101, [#allocation2]
      %s104 = sadd.s32 %s19, 5
      %s105 = sadd.s32 %s12, %s104
      %s106 = sld [smem:[#allocation4 + %s105]]
      %s107 = smul.addr %s106, 16
      %s108 = scalar_lea.hbm %s1, %s107
      %s109 = scalar_lea.vmem [#allocation5], %s104
      // Predicated region
      $region29: #{tpu_custom_call.1} parent=5 // pred_check
        _
      $region30: #{tpu_custom_call.1} parent=5 // pred_check_branch
        %111 = sbr.rel target = $region32
      $region31: #{tpu_custom_call.1} parent=5 // pred_region
        %112 = sst [smem:[#allocation9]] [#allocation20]
        %113 = sst [smem:[#allocation10]] [#allocation19]
      $region32: #{tpu_custom_call.1} parent=5 // pred_fallthru
        _
      %115 = shalt.err (0)
      %s117 = sshll.u32 %s109, 4
      %s118 = int_to_ptr.vmem [resolvable:$true] %s117
      %120 = dma.hbm_to_vmem [thread:$0]  %s108, 16, %s118, [#allocation2]
      %s121 = sadd.s32 %s19, 6
      %s122 = sadd.s32 %s12, %s121
      %s123 = sld [smem:[#allocation4 + %s122]]
      %s124 = smul.addr %s123, 16
      %s125 = scalar_lea.hbm %s1, %s124
      %s126 = scalar_lea.vmem [#allocation5], %s121
      // Predicated region
      $region33: #{tpu_custom_call.1} parent=5 // pred_check
        _
      $region34: #{tpu_custom_call.1} parent=5 // pred_check_branch
        %128 = sbr.rel target = $region36
      $region35: #{tpu_custom_call.1} parent=5 // pred_region
        %129 = sst [smem:[#allocation9]] [#allocation22]
        %130 = sst [smem:[#allocation10]] [#allocation21]
      $region36: #{tpu_custom_call.1} parent=5 // pred_fallthru
        _
      %132 = shalt.err (0)
      %s134 = sshll.u32 %s126, 4
      %s135 = int_to_ptr.vmem [resolvable:$true] %s134
      %137 = dma.hbm_to_vmem [thread:$0]  %s125, 16, %s135, [#allocation2]
      %s138 = sadd.s32 %s19, 7
      %s139 = sadd.s32 %s12, %s138
      %s140 = sld [smem:[#allocation4 + %s139]]
      %s141 = smul.addr %s140, 16
      %s142 = scalar_lea.hbm %s1, %s141
      %s143 = scalar_lea.vmem [#allocation5], %s138
      // Predicated region
      $region37: #{tpu_custom_call.1} parent=5 // pred_check
        _
      $region38: #{tpu_custom_call.1} parent=5 // pred_check_branch
        %145 = sbr.rel target = $region40
      $region39: #{tpu_custom_call.1} parent=5 // pred_region
        %146 = sst [smem:[#allocation9]] [#allocation24]
        %147 = sst [smem:[#allocation10]] [#allocation23]
      $region40: #{tpu_custom_call.1} parent=5 // pred_fallthru
        _
      %149 = shalt.err (0)
      %s151 = sshll.u32 %s143, 4
      %s152 = int_to_ptr.vmem [resolvable:$true] %s151
      %154 = dma.hbm_to_vmem [thread:$0]  %s142, 16, %s152, [#allocation2]
    $region6: #{tpu_custom_call.1} parent=1 // loop_footer
      %s18 = sadd.s32 1, %s14
    $region7: #{tpu_custom_call.1} parent=1 // loop_footer_branch
      %13 = sbr.rel target = $region3
    $region8: #{tpu_custom_call.1} parent=1 // loop_exit
      _
    %s155 = smul.u32 16, 1
    %s156 = sshll.u32 %s155, 4
    %157 = dma.done [#allocation2], %s156
    %v158 = vld [vmem:[#allocation5] sm:$0xff]
    %v159 = vld [vmem:[#allocation5 + $0x8] sm:$0xff]
    %v160 = vmul.f32 %v158, 11.313708
    %v161 = vmul.f32 %v159, 11.313708
    %162 = vst [vmem:[#allocation5] sm:$0xff] %v160
    %163 = vst [vmem:[#allocation5 + $0x8] sm:$0xff] %v161
    // Predicated region
    $region41: #{tpu_custom_call.1} parent=1 // pred_check
      _
    $region42: #{tpu_custom_call.1} parent=1 // pred_check_branch
      %165 = sbr.rel (0) target = $region44
    $region43: #{tpu_custom_call.1} parent=1 // pred_region
      %s167 = ssub.s32 256, 256
      %168 = vsyncadd [#allocation6], %s167
      %s169 = sshll.u32 [#allocation5], 4
      %s170 = int_to_ptr.vmem [resolvable:$true] %s169
      %175 = dma.vmem_to_hbm [thread:$0]  %s170, 256, %s2, [#allocation6], 128, 128, 8
    $region44: #{tpu_custom_call.1} parent=1 // pred_fallthru
      _
    // Predicated region
    $region45: #{tpu_custom_call.1} parent=1 // pred_check
      _
    $region46: #{tpu_custom_call.1} parent=1 // pred_check_branch
      %177 = sbr.rel (0) target = $region48
    $region47: #{tpu_custom_call.1} parent=1 // pred_region
      %178 = dma.done [#allocation6], 256
    $region48: #{tpu_custom_call.1} parent=1 // pred_fallthru
      _
    %179 = vsyncpa [#allocation6], 1
  %180 = vsyncmov [#allocation2]
  %s181 = vpop.sfrf %180
  %p182 = scmp.eq.s32.totalorder %s181, 0
  %p183 = pneg %p182
  %185 = shalt.err (%p183)

</llo_original>
